<compile_context>
chip_gen: v6e
topology: v6e:2x2x1
jax: 0.10.0
libtpu: 0.0.40
codegen_flags: <defaults>
</compile_context>

<pallas_src>
import functools

import jax
import jax.numpy as jnp
from jax import lax
from jax.experimental import pallas as pl
from jax.experimental.pallas import tpu as pltpu


def _logit_mse_kernel(pred_ref, ref_ref, out_ref, acc_ref, *,
                      target, cs, nc_p, s_total, needs_mask):
    """Accumulate sum of squared 'logit errors' over the spatial (column) axis.

    Grid = (row_blocks, spatial_parallel_parts, spatial_reduce_blocks); the
    reduction axis is innermost.  acc_ref is a tiny (rb, 1) f32 VMEM partial.
    """
    j = pl.program_id(2)

    @pl.when(j == 0)
    def _init():
        acc_ref[...] = jnp.zeros_like(acc_ref)

    p = pred_ref[...].astype(jnp.float32)
    r = ref_ref[...].astype(jnp.float32)
    e = p + (jnp.float32(1.0) - jnp.float32(2.0) * r) * jnp.float32(target)
    e2 = e * e

    if needs_mask:
        # Zero contributions from columns past the true spatial extent
        # (partial last block and fully out-of-range clamped blocks).
        col0 = (pl.program_id(1) * nc_p + j) * cs
        col = col0 + lax.broadcasted_iota(jnp.int32, e2.shape, dimension=1)
        e2 = jnp.where(col < s_total, e2, jnp.float32(0.0))

    # Lane reduce (XLU) into a tiny per-row partial; no full-tile accumulator.
    acc_ref[...] += jnp.sum(e2, axis=-1, keepdims=True)

    @pl.when(j == nc_p - 1)
    def _finalize():
        out_ref[0, 0] = jnp.sum(acc_ref[...])


def _pick_row_tile(n, multiple, cap):
    """Largest divisor of n that is a multiple of `multiple` and <= cap.

    Falls back to n itself (full extent, always a legal block dim) when no
    such divisor exists.
    """
    cap = max(multiple, min(cap, n))
    best = None
    d = multiple
    while d <= cap:
        if n % d == 0:
            best = d
        d += multiple
    return best if best is not None else n


def _round_up(x, m):
    return ((x + m - 1) // m) * m


def logit_mse_loss(pred, ref, *, target=5.0, target_tile_bytes=6 * 1024 * 1024):
    """Pallas LogitMSELoss (default config: no mask, unweighted, 'mean').

    `pred`/`ref` are (B, C, *spatial); `ref` is a floating one-hot reference
    (bf16/int8 are fine — the kernel promotes to f32 internally).
    """
    B, C = pred.shape[0], pred.shape[1]
    S = 1
    for d in pred.shape[2:]:
        S *= d
    BC = B * C

    pred2 = pred.reshape(BC, S)
    ref2 = ref.reshape(BC, S)          # no wrapper cast; kernel promotes to f32

    # Sublane granularity for the narrowest streamed dtype
    # (f32 -> 8, bf16 -> 16, int8/fp8 -> 32).
    min_itemsize = min(pred2.dtype.itemsize, ref2.dtype.itemsize)
    max_itemsize = max(pred2.dtype.itemsize, ref2.dtype.itemsize)
    sub = 32 // max(1, min_itemsize)

    # Per-input tile budget: 4-8 MiB keeps the ~0.35 us per-grid-step overhead
    # in the single-digit % range on v7x while the total double-buffered
    # footprint stays well under v7x's 64 MiB VMEM.
    tile_budget = min(int(target_tile_bytes), 8 * 1024 * 1024)
    target_elems = max(sub * 128, tile_budget // max_itemsize)

    s_pad = _round_up(S, 128)

    # Row tile: an exact divisor of BC (multiple of `sub`) so row blocks never
    # need masking; fallback is the (small) full BC extent.
    row_cap = max(sub, target_elems // s_pad)
    rb = _pick_row_tile(BC, sub, cap=row_cap)
    nr = BC // rb

    # Column tile: any multiple of 128; the tail is handled by the in-kernel
    # mask, so there is no cs=S fallback anymore.
    cs = max(128, (target_elems // rb) // 128 * 128)
    cs = min(cs, s_pad)
    nc = -(-S // cs)                                   # cdiv

    # Megacore (v7x): if there is only one row-block, split the spatial axis
    # into two "parallel" halves so both TensorCores stream HBM.
    P = 1 if nr >= 2 else min(2, nc)
    nc_p = -(-nc // P)

    needs_mask = (P * nc_p * cs) != S
    if P * nc_p > nc:
        # Fully out-of-range column blocks exist (odd nc split in half):
        # clamp the DMA index; the in-kernel mask zeroes their contribution.
        last = nc - 1
        col_map = lambda i, pp, j: (i, jnp.minimum(pp * nc_p + j, last))
    else:
        col_map = lambda i, pp, j: (i, pp * nc_p + j)

    scale = 1.0 / float(B * C * S)
    kernel = functools.partial(_logit_mse_kernel, target=float(target),
                               cs=cs, nc_p=nc_p, s_total=S,
                               needs_mask=needs_mask)

    # Actual VMEM footprint: 2 pipeline buffers per input + tiny accumulator.
    tile_bytes = rb * cs * (pred2.dtype.itemsize + ref2.dtype.itemsize)
    acc_bytes = _round_up(rb, 8) * 128 * 4
    footprint = 2 * tile_bytes + acc_bytes
    vmem_limit = min(max(int(footprint * 1.25) + (2 << 20), 16 << 20), 48 << 20)

    n_elems = BC * S
    cost = pl.CostEstimate(
        flops=5 * n_elems,
        transcendentals=0,
        bytes_accessed=n_elems * (pred2.dtype.itemsize + ref2.dtype.itemsize)
        + nr * P * 4,
    )

    partials = pl.pallas_call(
        kernel,
        out_shape=jax.ShapeDtypeStruct((nr, P), jnp.float32),
        grid_spec=pltpu.PrefetchScalarGridSpec(
            num_scalar_prefetch=0,
            grid=(nr, P, nc_p),
            in_specs=[
                pl.BlockSpec((rb, cs), col_map),
                pl.BlockSpec((rb, cs), col_map),
            ],
            out_specs=pl.BlockSpec((1, 1), lambda i, pp, j: (i, pp),
                                   memory_space=pltpu.SMEM),
            scratch_shapes=[pltpu.VMEM((rb, 1), jnp.float32)],
        ),
        compiler_params=pltpu.CompilerParams(
            # Row-block and spatial-half axes are independent (sharded across
            # v7x's 2 TensorCores); the innermost axis carries the reduction.
            dimension_semantics=("parallel", "parallel", "arbitrary"),
            vmem_limit_bytes=vmem_limit,
        ),
        cost_estimate=cost,
    )(pred2, ref2)

    # Per-(row-block, half) f32 partials -> final 'mean' reduction in the wrapper.
    return jnp.sum(partials) * jnp.float32(scale)


def _reference_loss(pred, ref, target=5.0):
    """Pure-JAX reference mirroring forward_onehot (mask=None, weights=False, 'mean')."""
    B, C = pred.shape[0], pred.shape[1]
    p = pred.reshape(B, C, -1).astype(jnp.float32)
    r = ref.reshape(B, C, -1).astype(jnp.float32)
    e = p + (1.0 - 2.0 * r) * target
    l = jnp.sum(e * e, axis=-1) / p.shape[-1]   # (B, C)
    l = jnp.mean(l, axis=-1)                    # (B,)
    return jnp.mean(l)                          # scalar


if __name__ == "__main__":
    key = jax.random.PRNGKey(0)

    def _onehot_ref(k, B, C, spatial):
        labels = jax.random.randint(k, (B, 1) + spatial, 0, C)
        classes = jnp.arange(C).reshape((1, C) + (1,) * len(spatial))
        return (labels == classes).astype(jnp.float32)

    cases = [
        # (B, C, spatial, target_tile_bytes)
        (2, 4, (16, 16), 6 * 1024 * 1024),  # single-tile fast path (no mask)
        (2, 4, (64, 64), 32 * 1024),        # 2-way parallel spatial split + multi-step reduction
        (2, 3, (12, 25), 4 * 1024),         # full-extent row block (BC=6), masked tail, clamped OOB block
    ]

    for idx, (B, C, spatial, ttb) in enumerate(cases):
        key, k1, k2 = jax.random.split(key, 3)
        pred = jax.random.normal(k1, (B, C) + spatial, dtype=jnp.float32)
        # Floating-point one-hot reference -> forward_onehot path of the module.
        ref = _onehot_ref(k2, B, C, spatial)

        loss = logit_mse_loss(pred, ref, target=5.0, target_tile_bytes=ttb)
        loss = jax.block_until_ready(loss)

        expected = _reference_loss(pred, ref, target=5.0)
        assert jnp.allclose(loss, expected, rtol=1e-5, atol=1e-5), (idx, loss, expected)

    print("KERNEL_OK")
</pallas_src>

<mosaic_0001>
module attributes {stable_mosaic.version = 11 : i64} {
  func.func @_logit_mse_kernel(%arg0: i32, %arg1: i32, %arg2: i32, %arg3: memref<8x256xf32, #tpu.memory_space<vmem>>, %arg4: memref<8x256xf32, #tpu.memory_space<vmem>>, %arg5: memref<1x1xf32, #tpu.memory_space<smem>>, %arg6: memref<8x1xf32, #tpu.memory_space<vmem>>) attributes {dimension_semantics = [#tpu.dimension_semantics<parallel>, #tpu.dimension_semantics<parallel>, #tpu.dimension_semantics<arbitrary>], iteration_bounds = array<i64: 1, 1, 1>, scalar_prefetch = 0 : i64, scratch_operands = 1 : i64, tpu.core_type = #tpu.core_type<tc>, window_params = [{transform_indices = @transform_0, window_bounds = array<i64: 8, 256>}, {transform_indices = @transform_1, window_bounds = array<i64: 8, 256>}, {transform_indices = @transform_2, window_bounds = array<i64: 1, 1>}]} {
    %c0_i32 = arith.constant 0 : i32
    %0 = arith.cmpi eq, %arg2, %c0_i32 : i32
    %1 = arith.extui %0 : i1 to i32
    %c0_i32_0 = arith.constant 0 : i32
    %2 = arith.cmpi ne, %1, %c0_i32_0 : i32
    scf.if %2 {
      %cst_13 = arith.constant 0.000000e+00 : f32
      %21 = vector.broadcast %cst_13 : f32 to vector<8x1xf32>
      %c0_14 = arith.constant 0 : index
      %c0_15 = arith.constant 0 : index
      %22 = vector.load %arg6[%c0_14, %c0_15] : memref<8x1xf32, #tpu.memory_space<vmem>>, vector<8x1xf32>
      tpu.vector_store %arg6[%c0_14, %c0_15], %21 {strides = array<i32>} : memref<8x1xf32, #tpu.memory_space<vmem>>, vector<8x1xf32>,
    } else {
    }
    %c0 = arith.constant 0 : index
    %c0_1 = arith.constant 0 : index
    %3 = vector.load %arg3[%c0, %c0_1] : memref<8x256xf32, #tpu.memory_space<vmem>>, vector<8x256xf32>
    %c0_2 = arith.constant 0 : index
    %c0_3 = arith.constant 0 : index
    %4 = vector.load %arg4[%c0_2, %c0_3] : memref<8x256xf32, #tpu.memory_space<vmem>>, vector<8x256xf32>
    %cst = arith.constant 2.000000e+00 : f32
    %5 = vector.broadcast %cst : f32 to vector<8x256xf32>
    %6 = arith.mulf %5, %4 : vector<8x256xf32>
    %cst_4 = arith.constant 1.000000e+00 : f32
    %7 = vector.broadcast %cst_4 : f32 to vector<8x256xf32>
    %8 = arith.subf %7, %6 : vector<8x256xf32>
    %cst_5 = arith.constant 5.000000e+00 : f32
    %9 = vector.broadcast %cst_5 : f32 to vector<8x256xf32>
    %10 = arith.mulf %8, %9 : vector<8x256xf32>
    %11 = arith.addf %3, %10 : vector<8x256xf32>
    %12 = arith.mulf %11, %11 : vector<8x256xf32>
    %c0_6 = arith.constant 0 : index
    %c0_7 = arith.constant 0 : index
    %13 = vector.load %arg6[%c0_6, %c0_7] : memref<8x1xf32, #tpu.memory_space<vmem>>, vector<8x1xf32>
    %cst_8 = arith.constant dense<0.000000e+00> : vector<8xf32>
    %14 = vector.multi_reduction <add>, %12, %cst_8 [1] : vector<8x256xf32> to vector<8xf32>
    %15 = vector.shape_cast %14 : vector<8xf32> to vector<8x1xf32>
    %16 = arith.addf %13, %15 : vector<8x1xf32>
    %c0_9 = arith.constant 0 : index
    %c0_10 = arith.constant 0 : index
    %17 = vector.load %arg6[%c0_9, %c0_10] : memref<8x1xf32, #tpu.memory_space<vmem>>, vector<8x1xf32>
    tpu.vector_store %arg6[%c0_9, %c0_10], %16 {strides = array<i32>} : memref<8x1xf32, #tpu.memory_space<vmem>>, vector<8x1xf32>,
    %c0_i32_11 = arith.constant 0 : i32
    %18 = arith.cmpi eq, %arg2, %c0_i32_11 : i32
    %19 = arith.extui %18 : i1 to i32
    %c0_i32_12 = arith.constant 0 : i32
    %20 = arith.cmpi ne, %19, %c0_i32_12 : i32
    scf.if %20 {
      %c0_13 = arith.constant 0 : index
      %c0_14 = arith.constant 0 : index
      %21 = vector.load %arg6[%c0_13, %c0_14] : memref<8x1xf32, #tpu.memory_space<vmem>>, vector<8x1xf32>
      %22 = vector.shape_cast %21 : vector<8x1xf32> to vector<1x8x1xf32>
      %cst_15 = arith.constant dense<0.000000e+00> : vector<1xf32>
      %23 = vector.multi_reduction <add>, %22, %cst_15 [1, 2] : vector<1x8x1xf32> to vector<1xf32>
      %24 = vector.shape_cast %23 : vector<1xf32> to vector<1x1x1xf32>
      %25 = vector.extract %24[0, 0, 0] : f32 from vector<1x1x1xf32>
      %c0_16 = arith.constant 0 : index
      %c0_17 = arith.constant 0 : index
      %26 = memref.load %arg5[%c0_16, %c0_17] : memref<1x1xf32, #tpu.memory_space<smem>>
      memref.store %25, %arg5[%c0_16, %c0_17] : memref<1x1xf32, #tpu.memory_space<smem>>
    } else {
    }
    return
  }
  func.func @transform_0(%arg0: i32, %arg1: i32, %arg2: i32) -> (i32, i32) {
    %c1_i32 = arith.constant 1 : i32
    %0 = arith.muli %arg1, %c1_i32 : i32
    %1 = arith.addi %0, %arg2 : i32
    %c0_i32 = arith.constant 0 : i32
    return %arg0, %1 : i32, i32
  }
  func.func @transform_1(%arg0: i32, %arg1: i32, %arg2: i32) -> (i32, i32) {
    %c1_i32 = arith.constant 1 : i32
    %0 = arith.muli %arg1, %c1_i32 : i32
    %1 = arith.addi %0, %arg2 : i32
    %c0_i32 = arith.constant 0 : i32
    return %arg0, %1 : i32, i32
  }
  func.func @transform_2(%arg0: i32, %arg1: i32, %arg2: i32) -> (i32, i32) {
    %c0_i32 = arith.constant 0 : i32
    return %arg0, %arg1 : i32, i32
  }
}

</mosaic_0001>

<llo_original>
// kernel: tpu_custom_call.1
$region0: #{tpu_custom_call.1}
  #allocation0 [shape = 'u32[]', space=smem, size = 0x4, offset = 0x4, fixed_abs, tag = 'smem constant byte address 0x4 - core index']
  #allocation1 [shape = 'u32[144,128]{1,0:T(1,128)}', space=vmem, size = 0x12000, scoped, tag = 'internal scratch']
  #allocation2 [shape = 'f32[8,1]{1,0:T(8,128)}', space=vmem, size = 0x1000, scoped, tag = 'scratch operand']
  %s0 = inlined_call_operand.hbm [shape: f32[8,256], index: 0, kind: input, shape index: {}]
  %s1 = inlined_call_operand.hbm [shape: f32[8,256], index: 1, kind: input, shape index: {}]
  %s2 = inlined_call_operand.hbm [shape: f32[1,1], index: 2, kind: output, shape index: {}]
  %s3 = sld [smem:[#allocation0]]
  $region34: #{tpu_custom_call.1} parent=0
    _
  %s5 = ssub.s32 1, %s3
  %s6 = scalar_select 0, %s5, %s3
  $region1: #{tpu_custom_call.1} parent=0
    #allocation3 [shape = 'u8[8192]{0}', space=vmem, size = 0x2000, scoped, tag = 'input window, operand 0, single buffered']
    #allocation4 [shape = 's32[1]{0}', space=sflag, size = 0x4, scoped, tag = 'scoped memory for tpu_custom_call.1']
    #allocation5 [shape = 's32[1]{0}', space=sflag, size = 0x4, scoped, tag = 'scoped memory for tpu_custom_call.1']
    #allocation6 [shape = 'u8[8192]{0}', space=vmem, size = 0x2000, scoped, tag = 'input window, operand 1, single buffered']
    #allocation7 [shape = 's32[1]{0}', space=sflag, size = 0x4, scoped, tag = 'scoped memory for tpu_custom_call.1']
    #allocation8 [shape = 'u8[512]{0}', space=smem, size = 0x200, scoped, tag = 'output window, operand 0, single buffered']
    %7 = vsyncpa [#allocation4], 0
    %8 = vsyncpa [#allocation7], 0
    %9 = vsyncpa [#allocation5], 0
    // Predicated region
    $region2: #{tpu_custom_call.1} parent=1 // pred_check
      _
    $region3: #{tpu_custom_call.1} parent=1 // pred_check_branch
      %11 = sbr.rel (0) target = $region5
    $region4: #{tpu_custom_call.1} parent=1 // pred_region
      %s12 = sadd.s32 0, 0
      %s13 = smul.u32 2, %s12
      %s15 = ssub.s32 256, 256
      %16 = vsyncadd [#allocation4], %s15
      %s17 = smul.addr %s13, 128
      %s18 = scalar_lea.hbm %s0, %s17
      %s20 = sshll.u32 [#allocation3], 4
      %s21 = int_to_ptr.vmem [resolvable:$true] %s20
      %23 = dma.hbm_to_vmem [thread:$0]  %s18, 256, %s21, [#allocation4]
    $region5: #{tpu_custom_call.1} parent=1 // pred_fallthru
      _
    // Predicated region
    $region6: #{tpu_custom_call.1} parent=1 // pred_check
      _
    $region7: #{tpu_custom_call.1} parent=1 // pred_check_branch
      %25 = sbr.rel (0) target = $region9
    $region8: #{tpu_custom_call.1} parent=1 // pred_region
      %s26 = sadd.s32 0, 0
      %s27 = smul.u32 2, %s26
      %s29 = ssub.s32 256, 256
      %30 = vsyncadd [#allocation7], %s29
      %s31 = smul.addr %s27, 128
      %s32 = scalar_lea.hbm %s1, %s31
      %s34 = sshll.u32 [#allocation6], 4
      %s35 = int_to_ptr.vmem [resolvable:$true] %s34
      %37 = dma.hbm_to_vmem [thread:$0]  %s32, 256, %s35, [#allocation7]
    $region9: #{tpu_custom_call.1} parent=1 // pred_fallthru
      _
    // Predicated region
    $region10: #{tpu_custom_call.1} parent=1 // pred_check
      _
    $region11: #{tpu_custom_call.1} parent=1 // pred_check_branch
      %39 = sbr.rel (0) target = $region13
    $region12: #{tpu_custom_call.1} parent=1 // pred_region
      %40 = dma.done [#allocation4], 256
    $region13: #{tpu_custom_call.1} parent=1 // pred_fallthru
      _
    // Predicated region
    $region14: #{tpu_custom_call.1} parent=1 // pred_check
      _
    $region15: #{tpu_custom_call.1} parent=1 // pred_check_branch
      %42 = sbr.rel (0) target = $region17
    $region16: #{tpu_custom_call.1} parent=1 // pred_region
      %43 = dma.done [#allocation7], 256
    $region17: #{tpu_custom_call.1} parent=1 // pred_fallthru
      _
    %s44 = sadd.s32 0, 0
    %s45 = smul.u32 2, %s44
    %s46 = sadd.s32 0, 0
    %s47 = smul.u32 2, %s46
    %p48 = scmp.eq.s32.totalorder 0, 0
    // Predicated region
    $region18: #{tpu_custom_call.1} parent=1 // pred_check
      %p49 = pneg %p48
    $region19: #{tpu_custom_call.1} parent=1 // pred_check_branch
      %51 = sbr.rel (%p49) target = $region21
    $region20: #{tpu_custom_call.1} parent=1 // pred_region
      %vm52 = vcmask 7168
      %53 = vst.msk [vmem:[#allocation2] sm:$0xff] %vm52, 0.0
    $region21: #{tpu_custom_call.1} parent=1 // pred_fallthru
      _
    %v54 = vld [vmem:[#allocation3] sm:$0xff]
    %v55 = vld [vmem:[#allocation3 + $0x8] sm:$0xff]
    %v56 = vld [vmem:[#allocation6] sm:$0xff]
    %v57 = vld [vmem:[#allocation6 + $0x8] sm:$0xff]
    %v58 = vmul.f32 %v56, 2.0
    %v59 = vmul.f32 %v57, 2.0
    %v60 = vsub.f32 1.0, %v58
    %v61 = vsub.f32 1.0, %v59
    %v62 = vmul.f32 %v60, 5.0
    %v63 = vmul.f32 %v61, 5.0
    %v64 = vadd.f32 %v54, %v62
    %v65 = vadd.f32 %v55, %v63
    %v66 = vmul.f32 %v64, %v64
    %v67 = vmul.f32 %v65, %v65
    %v68 = vld [vmem:[#allocation2] sm:$0xff]
    %v69 = vadd.f32 %v66, %v67
    %70 = vadd.xlane.f32.xlu0 %v69
    %v71 = vpop.xlane.xlu0 %70
    %v72 = vadd.f32 %v68, %v71
    %vm73 = vcmask 7168
    %74 = vst.msk [vmem:[#allocation2] sm:$0xff] %vm73, %v72
    // Predicated region
    $region22: #{tpu_custom_call.1} parent=1 // pred_check
      %p75 = pneg %p48
    $region23: #{tpu_custom_call.1} parent=1 // pred_check_branch
      %77 = sbr.rel (%p75) target = $region25
    $region24: #{tpu_custom_call.1} parent=1 // pred_region
      %v78 = vld [vmem:[#allocation2] sm:$0xff]
      %v79 = vsel %vm73, %v78, 0.0
      %80 = vadd.xlane.f32.xlu0 %v79
      %v81 = vpop.xlane.xlu0 %80
      %v82 = vrot.slane %v81, 4
      %v83 = vadd.f32 %v81, %v82
      %v84 = vrot.slane %v83, 2
      %v85 = vadd.f32 %v83, %v84
      %v86 = vrot.slane %v85, 1
      %v87 = vadd.f32 %v85, %v86
      %s88 = vtos %v87
      %s89 = scalar_lea.smem [#allocation8], 0
      %90 = sst [smem:[%s89]] %s88
    $region25: #{tpu_custom_call.1} parent=1 // pred_fallthru
      _
    // Predicated region
    $region26: #{tpu_custom_call.1} parent=1 // pred_check
      _
    $region27: #{tpu_custom_call.1} parent=1 // pred_check_branch
      %92 = sbr.rel (0) target = $region29
    $region28: #{tpu_custom_call.1} parent=1 // pred_region
      %s94 = ssub.s32 16, 16
      %95 = vsyncadd [#allocation5], %s94
      %98 = dma.smem_to_hbm [#allocation8], 16, %s2, [#allocation5]
    $region29: #{tpu_custom_call.1} parent=1 // pred_fallthru
      _
    // Predicated region
    $region30: #{tpu_custom_call.1} parent=1 // pred_check
      _
    $region31: #{tpu_custom_call.1} parent=1 // pred_check_branch
      %100 = sbr.rel (0) target = $region33
    $region32: #{tpu_custom_call.1} parent=1 // pred_region
      %101 = dma.done [#allocation5], 16
    $region33: #{tpu_custom_call.1} parent=1 // pred_fallthru
      _
    %102 = sfence
    %103 = vsyncpa [#allocation4], 1
    %104 = vsyncpa [#allocation7], 1
    %105 = vsyncpa [#allocation5], 1

</llo_original>
